<compile_context>
chip_gen: v7x
topology: tpu7x:2x2x1
jax: 0.10.0
libtpu: 0.0.40
codegen_flags: <defaults>
</compile_context>

<pallas_src>
import jax
import jax.numpy as jnp
from jax.experimental import pallas as pl
from jax.experimental.pallas import tpu as pltpu


def _round_up(x, m):
    return (x + m - 1) // m * m


def _inv_proj_kernel(x_ref, w_ref, b_ref, o_ref):
    # In-kernel operand cast (f32 -> bf16 when use_bf16); MXU with f32 acc.
    x = x_ref[...].astype(w_ref.dtype)
    acc = jnp.dot(x, w_ref[...], preferred_element_type=jnp.float32)
    o_ref[...] = (acc + b_ref[...]).astype(o_ref.dtype)


def _pick_tm(M, max_tm=1024):
    candidates = [c for c in (1024, 512, 256, 128, 64, 32, 16, 8) if c <= max_tm]
    # Prefer >=2 and even grid steps: the M axis is "parallel" and v7x shards
    # it across 2 TensorCores; a 1-step grid would idle one core.
    for tm in candidates:
        if M % tm == 0 and (M // tm) >= 2 and (M // tm) % 2 == 0:
            return tm
    for tm in candidates:
        if M % tm == 0 and (M // tm) >= 2:
            return tm
    for tm in candidates:
        if M % tm == 0:
            return tm
    return None  # ragged M: masked tail block


def _vmem_limit_bytes(tm, K, Npad, x_bytes, w_bytes, o_bytes):
    # Derived from actual buffer sizes (Pallas double-buffers every operand),
    # plus Mosaic internal-scratch headroom; clamped to ~75% of physical VMEM
    # so v7x (64 MiB/TC) keeps headroom while v5e/v6e (128 MiB) can go bigger.
    need = (2 * tm * K * x_bytes          # x tiles (double-buffered)
            + 2 * tm * Npad * o_bytes     # output tiles
            + 2 * K * Npad * w_bytes      # resident weight (2 buffers)
            + 2 * Npad * 4)               # bias
    need += 4 << 20
    need = max(need, 16 << 20)
    try:
        cap = int(getattr(pltpu.get_tpu_info(), "vmem_capacity_bytes", 64 << 20))
    except Exception:
        cap = 64 << 20
    return int(min(need, int(cap * 0.75)))


def _inv_proj_matmul(x_tok, w_flat, bias_flat, *, max_tm=1024, use_bf16=True):
    M, K = x_tok.shape
    K2, Nout = w_flat.shape
    assert K == K2

    # Lane-dense output: pad the (small, one-time) weight/bias columns to a
    # multiple of 128 so output stores are full-lane vst (matters for the demo
    # config; real VJEPA2 Nout=1536 is already lane-dense).
    Npad = max(_round_up(Nout, 128), 128)
    if Npad != Nout:
        w_flat = jnp.pad(w_flat, ((0, 0), (0, Npad - Nout)))
        bias_flat = jnp.pad(bias_flat, (0, Npad - Nout))

    if use_bf16:
        w_flat = w_flat.astype(jnp.bfloat16)   # tiny, one-time; x cast in-kernel
        out_dtype = jnp.bfloat16               # halves writeback + transpose read
    else:
        out_dtype = x_tok.dtype
    bias2d = bias_flat.reshape(1, Npad).astype(jnp.float32)

    tm = _pick_tm(M, max_tm)
    if tm is None:
        # Ragged M: no HBM roundtrip jnp.pad; Pallas masks the tail block.
        tm = min(max_tm, 128)
    grid_m = pl.cdiv(M, tm)

    vmem_limit = _vmem_limit_bytes(
        tm, K, Npad,
        x_tok.dtype.itemsize, w_flat.dtype.itemsize, jnp.dtype(out_dtype).itemsize)

    y = pl.pallas_call(
        _inv_proj_kernel,
        out_shape=jax.ShapeDtypeStruct((M, Npad), out_dtype),
        grid_spec=pltpu.PrefetchScalarGridSpec(
            num_scalar_prefetch=0,
            grid=(grid_m,),
            in_specs=[
                pl.BlockSpec((tm, K), lambda i: (i, 0)),
                # Constant index_map -> fetched once, VMEM-resident.
                pl.BlockSpec((K, Npad), lambda i: (0, 0)),
                pl.BlockSpec((1, Npad), lambda i: (0, 0)),
            ],
            out_specs=pl.BlockSpec((tm, Npad), lambda i: (i, 0)),
        ),
        compiler_params=pltpu.CompilerParams(
            dimension_semantics=("parallel",),
            vmem_limit_bytes=vmem_limit,
        ),
    )(x_tok, w_flat, bias2d)

    if Npad != Nout:
        y = y[:, :Nout]
    return y


class InverseVJEPA2PatchEmbeddings3DPallas:
    """JAX/Pallas port of InverseVJEPA2PatchEmbeddings3D."""

    def __init__(self, *, hidden_size, in_chans, tubelet_size, patch_size,
                 crop_size, key):
        self.hidden_size = hidden_size
        self.in_chans = in_chans
        self.tubelet_size = tubelet_size
        self.patch_size = patch_size
        self.num_patches_per_dim = crop_size // patch_size

        kw, kb = jax.random.split(key)
        # ConvTranspose3d weight: (in_channels, out_channels, kT, kH, kW)
        #                       = (hidden, in_chans, ts, ps, ps)
        wshape = (hidden_size, in_chans, tubelet_size, patch_size, patch_size)
        fan_in = in_chans * tubelet_size * patch_size * patch_size
        bound = 1.0 / (fan_in ** 0.5)
        self.weight = jax.random.uniform(kw, wshape, jnp.float32, -bound, bound)
        self.bias = jax.random.uniform(kb, (in_chans,), jnp.float32, -bound, bound)

    def __call__(self, x, *, use_bf16=True, out_dtype=None):
        # x: (B, N, hidden) with N = 8 * P * P
        B, N, H = x.shape
        P = self.num_patches_per_dim
        ts, ps, C = self.tubelet_size, self.patch_size, self.in_chans
        assert H == self.hidden_size and N == 8 * P * P
        if out_dtype is None:
            out_dtype = x.dtype

        # torch: transpose(1,2) then view(B, hidden, 8, P, P).  The token at
        # (b, t8, i, j) is x[b, (t8*P+i)*P + j, :], i.e. plain row order.
        x_tok = x.reshape(B * N, H)

        # Pre-permute ConvT weight columns to (kt, c, ki, kj) order so the
        # kernel output already matches the final (time, channel) ordering.
        out_dim = C * ts * ps * ps
        w_flat = jnp.transpose(self.weight, (0, 2, 1, 3, 4)).reshape(H, out_dim)
        bias_flat = jnp.tile(jnp.repeat(self.bias, ps * ps), ts)

        y = _inv_proj_matmul(x_tok, w_flat, bias_flat, use_bf16=use_bf16)

        # Scatter each token's (ts, C, ps, ps) block into the video; runs in
        # bf16 when use_bf16 (half the transpose's HBM traffic); cast to the
        # requested dtype only at the very end.
        # TODO(synk): fuse this scatter into the kernel's output BlockSpec
        # (needs an in-kernel sublane<->lane relayout of the (j, kj) axes).
        y = y.reshape(B, 8, P, P, ts, C, ps, ps)
        y = jnp.transpose(y, (0, 1, 4, 5, 2, 6, 3, 7))   # (B,8,ts,C,P,ps,P,ps)
        y = y.reshape(B, 8 * ts, C, P * ps, P * ps)
        return y.astype(out_dtype)


def _reference(module, x, *, use_bf16=True, out_dtype=None):
    """Pure-JAX reference (einsum) matching the kernel's rounding behaviour."""
    B, N, H = x.shape
    P = module.num_patches_per_dim
    ts, ps, C = module.tubelet_size, module.patch_size, module.in_chans
    if out_dtype is None:
        out_dtype = x.dtype
    w = module.weight
    if use_bf16:
        x = x.astype(jnp.bfloat16).astype(jnp.float32)
        w = w.astype(jnp.bfloat16).astype(jnp.float32)
    xv = x.reshape(B, 8, P, P, H)
    out = jnp.einsum("btijh,hcklm->btijcklm", xv, w,
                     preferred_element_type=jnp.float32)
    out = out + module.bias[None, None, None, None, :, None, None, None]
    if use_bf16:
        out = out.astype(jnp.bfloat16).astype(jnp.float32)  # match bf16 store
    out = jnp.transpose(out, (0, 1, 5, 4, 2, 6, 3, 7))
    return out.reshape(B, 8 * ts, C, P * ps, P * ps).astype(out_dtype)


if __name__ == "__main__":
    key = jax.random.PRNGKey(0)
    kparam, kx = jax.random.split(key)

    # Small config: crop=16, patch=4 -> P=4; tubelet=2; in_chans=3; hidden=128.
    # (Real VJEPA2 shapes: hidden=1024, crop=256, patch=16, tubelet=2.)
    hidden_size, in_chans, tubelet, patch, crop = 128, 3, 2, 4, 16
    module = InverseVJEPA2PatchEmbeddings3DPallas(
        hidden_size=hidden_size, in_chans=in_chans, tubelet_size=tubelet,
        patch_size=patch, crop_size=crop, key=kparam)

    B = 2
    P = crop // patch
    N = 8 * P * P                                   # 128 tokens per example
    x = jax.random.normal(kx, (B, N, hidden_size), jnp.float32)

    fwd = jax.jit(module.__call__)
    out = jax.block_until_ready(fwd(x))

    ref = _reference(module, x)
    assert out.shape == (B, 8 * tubelet, in_chans, crop, crop)
    assert out.dtype == jnp.float32
    max_err = float(jnp.max(jnp.abs(out - ref)))
    assert jnp.allclose(out, ref, atol=2e-2, rtol=2e-2), (
        "max abs err = %f" % max_err)

    print("KERNEL_OK")
</pallas_src>

<mosaic_0001>
module attributes {stable_mosaic.version = 11 : i64} {
  func.func @_inv_proj_kernel(%arg0: i32, %arg1: memref<128x128xf32, #tpu.memory_space<vmem>>, %arg2: memref<128x128xbf16, #tpu.memory_space<vmem>>, %arg3: memref<1x128xf32, #tpu.memory_space<vmem>>, %arg4: memref<128x128xbf16, #tpu.memory_space<vmem>>) attributes {dimension_semantics = [#tpu.dimension_semantics<parallel>], iteration_bounds = array<i64: 2>, scalar_prefetch = 0 : i64, scratch_operands = 0 : i64, tpu.core_type = #tpu.core_type<tc>, window_params = [{transform_indices = @transform_0, window_bounds = array<i64: 128, 128>}, {pipeline_mode = #tpu.pipeline_mode<synchronous>, transform_indices = @transform_1, window_bounds = array<i64: 128, 128>}, {pipeline_mode = #tpu.pipeline_mode<synchronous>, transform_indices = @transform_2, window_bounds = array<i64: 1, 128>}, {transform_indices = @transform_3, window_bounds = array<i64: 128, 128>}]} {
    %c0 = arith.constant 0 : index
    %c0_0 = arith.constant 0 : index
    %0 = vector.load %arg1[%c0, %c0_0] : memref<128x128xf32, #tpu.memory_space<vmem>>, vector<128x128xf32>
    %1 = arith.truncf %0 : vector<128x128xf32> to vector<128x128xbf16>
    %c0_1 = arith.constant 0 : index
    %c0_2 = arith.constant 0 : index
    %2 = vector.load %arg2[%c0_1, %c0_2] : memref<128x128xbf16, #tpu.memory_space<vmem>>, vector<128x128xbf16>
    %cst = arith.constant dense<0.000000e+00> : vector<128x128xf32>
    %3 = tpu.matmul %1, %2, %cst {dimension_numbers = #tpu.dot_dimension_numbers<[1], [0], [0], [1], [0, 0, 1, 1], [], []>} : vector<128x128xbf16>, vector<128x128xbf16>, vector<128x128xf32> -> vector<128x128xf32>
    %c0_3 = arith.constant 0 : index
    %c0_4 = arith.constant 0 : index
    %4 = vector.load %arg3[%c0_3, %c0_4] : memref<1x128xf32, #tpu.memory_space<vmem>>, vector<1x128xf32>
    %5 = vector.broadcast %4 : vector<1x128xf32> to vector<128x128xf32>
    %6 = arith.addf %3, %5 : vector<128x128xf32>
    %7 = arith.truncf %6 : vector<128x128xf32> to vector<128x128xbf16>
    %c0_5 = arith.constant 0 : index
    %c0_6 = arith.constant 0 : index
    %8 = vector.load %arg4[%c0_5, %c0_6] : memref<128x128xbf16, #tpu.memory_space<vmem>>, vector<128x128xbf16>
    tpu.vector_store %arg4[%c0_5, %c0_6], %7 {strides = array<i32>} : memref<128x128xbf16, #tpu.memory_space<vmem>>, vector<128x128xbf16>,
    return
  }
  func.func @transform_0(%arg0: i32) -> (i32, i32) {
    %c0_i32 = arith.constant 0 : i32
    %c0_i32_0 = arith.constant 0 : i32
    return %arg0, %c0_i32 : i32, i32
  }
  func.func @transform_1(%arg0: i32) -> (i32, i32) {
    %c0_i32 = arith.constant 0 : i32
    %c0_i32_0 = arith.constant 0 : i32
    %c0_i32_1 = arith.constant 0 : i32
    return %c0_i32, %c0_i32_0 : i32, i32
  }
  func.func @transform_2(%arg0: i32) -> (i32, i32) {
    %c0_i32 = arith.constant 0 : i32
    %c0_i32_0 = arith.constant 0 : i32
    %c0_i32_1 = arith.constant 0 : i32
    return %c0_i32, %c0_i32_0 : i32, i32
  }
  func.func @transform_3(%arg0: i32) -> (i32, i32) {
    %c0_i32 = arith.constant 0 : i32
    %c0_i32_0 = arith.constant 0 : i32
    return %arg0, %c0_i32 : i32, i32
  }
}

</mosaic_0001>

<llo_original>
// kernel: tile.7
$region0: #{tile.7}
  %s0 = inlined_call_operand.vmem [shape: f32[2,48], index: 0, kind: input, shape index: {}]
  %s1 = inlined_call_operand.vmem [shape: f32[96], index: 1, kind: output, shape index: {}]
  $region1: #{tile.7} parent=0
    #allocation0 [shape = 'u8[4096]{0}', space=vmem, size = 0x1000, scoped, tag = 'scoped mem for output reshape']
    #allocation1 [shape = 'u8[4096]{0}', space=vmem, size = 0x1000, scoped, tag = 'scoped mem for input reshape']
    %s3 = sshllo.u32 0, 2
    %v4 = vld [vmem:[%s0] sm:%s3]
    %5 = vst [vmem:[#allocation1] sm:%s3] %v4
    %v6 = vld [vmem:[#allocation1] sm:$0x1]
    %vm7 = vcmask 392192
    %8 = vst.msk [vmem:[#allocation0] sm:$0x1] %vm7, %v6
    %s9 = scalar_lea.vmem [#allocation1], 1
    %v10 = vld [vmem:[%s9] sm:$0x1]
    %11 = vrot.lane.b32.xlu0 %v10, 48
    %v12 = vpop.permute.xlu0 %11
    %vm13 = vcmask 785792
    %14 = vst.msk [vmem:[#allocation0] sm:$0x1] %vm13, %v12
    %s16 = sshllo.u32 0, 1
    %v18 = vld [vmem:[#allocation0] sm:%s16]
    %s19 = sshllo.u32 0, 1
    %20 = vst [vmem:[%s1] sm:%s19] %v18

// kernel: tile.5
$region0: #{tile.5}
  %s0 = inlined_call_operand.vmem [shape: f32[3,16], index: 0, kind: input, shape index: {}]
  %s1 = inlined_call_operand.vmem [shape: f32[48], index: 1, kind: output, shape index: {}]
  $region1: #{tile.5} parent=0
    #allocation0 [shape = 'u8[4096]{0}', space=vmem, size = 0x1000, scoped, tag = 'scoped mem for output reshape']
    #allocation1 [shape = 'u8[4096]{0}', space=vmem, size = 0x1000, scoped, tag = 'scoped mem for input reshape']
    %s3 = sshllo.u32 0, 4
    %v4 = vld [vmem:[%s0] sm:%s3]
    %5 = vst [vmem:[#allocation1] sm:%s3] %v4
    %v6 = vld [vmem:[#allocation1] sm:$0x1]
    %vm7 = vcmask 130048
    %8 = vst.msk [vmem:[#allocation0] sm:$0x1] %vm7, %v6
    %s9 = scalar_lea.vmem [#allocation1], 2
    %v10 = vld [vmem:[%s9] sm:$0x1]
    %11 = vrot.lane.b32.xlu0 %v10, 32
    %v12 = vpop.permute.xlu0 %11
    %vm13 = vcmask 392448
    %14 = vst.msk [vmem:[#allocation0] sm:$0x1] %vm13, %v12
    %s15 = scalar_lea.vmem [#allocation1], 1
    %v16 = vld [vmem:[%s15] sm:$0x1]
    %17 = vrot.lane.b32.xlu0 %v16, 16
    %v18 = vpop.permute.xlu0 %17
    %vm19 = vcmask 261248
    %20 = vst.msk [vmem:[#allocation0] sm:$0x1] %vm19, %v18
    %s22 = sshllo.u32 0, 1
    %v24 = vld [vmem:[#allocation0] sm:%s22]
    %s25 = sshllo.u32 0, 1
    %26 = vst [vmem:[%s1] sm:%s25] %v24

// kernel: tile.6
$region0: #{tile.6}
  #allocation0 [shape = 's32[1]{0}', space=sflag, size = 0x4, scoped, tag = 'scoped memory for tile.6']
  %s0 = inlined_call_operand.vmem [shape: f32[48], index: 0, kind: input, shape index: {}]
  %s1 = inlined_call_operand.vmem [shape: f32[2,48], index: 1, kind: output, shape index: {}]
  // Predicated region
  $region2: #{tile.6} parent=0 // pred_check
    _
  $region3: #{tile.6} parent=0 // pred_check_branch
    %3 = sbr.rel (0) target = $region5
  $region4: #{tile.6} parent=0 // pred_region
    _
  $region5: #{tile.6} parent=0 // pred_fallthru
    _
  %v4 = vld [vmem:[%s0] ss:$0 sm:$0xff]
  %5 = vst [vmem:[%s1] sm:$0x3] %v4

// kernel: a_call__.1
$region0: #{a_call__.1}
  #allocation0 [shape = 'u32[]', space=smem, size = 0x4, offset = 0x4, fixed_abs, tag = 'smem constant byte address 0x4 - core index']
  #allocation1 [shape = 'u32[144,128]{1,0:T(1,128)}', space=vmem, size = 0x12000, scoped, tag = 'internal scratch']
  %s0 = inlined_call_operand.hbm [shape: f32[256,128], index: 0, kind: input, shape index: {}]
  %s1 = inlined_call_operand.hbm [shape: bf16[128,128], index: 1, kind: input, shape index: {}]
  %s2 = inlined_call_operand.vmem [shape: f32[1,128], index: 2, kind: input, shape index: {}]
  %s3 = inlined_call_operand.vmem [shape: bf16[256,128], index: 3, kind: output, shape index: {}]
  %s4 = sld [smem:[#allocation0]]
  $region53: #{a_call__.1} parent=0
    _
  %s6 = ssub.s32 1, %s4
  %s7 = scalar_select 0, %s6, %s4
  $region1: #{a_call__.1} parent=0
    #allocation2 [shape = 'u8[131072]{0}', space=vmem, size = 0x20000, scoped, tag = 'input window, operand 0']
    #allocation3 [shape = 's32[2]{0}', space=sflag, size = 0x8, scoped, tag = 'scoped memory for a_call__.1']
    #allocation4 [shape = 'u8[32768]{0}', space=vmem, size = 0x8000, scoped, tag = 'input window, operand 1, single buffered']
    #allocation5 [shape = 's32[1]{0}', space=sflag, size = 0x4, scoped, tag = 'scoped memory for a_call__.1']
    %8 = vsyncpa [#allocation3], 0
    %s9 = scalar_lea.sflag [#allocation3], 1
    %10 = vsyncpa %s9, 0
    %11 = vsyncpa [#allocation5], 0
    loop: start=0, step=1, limit=4
    $region2: #{a_call__.1} parent=1 // loop_pre_header
      _
    $region3: #{a_call__.1} parent=1 // loop_header
      %s13 = sphi 0, %s17
      %p14 = scmp.ge.s32.totalorder %s13, 4
      %s23 = sphi 0, %s25
      %s26 = sphi 0, %s23
      %s27 = sphi 0, %s26
      %s43 = sphi 0, %s27
      %s47 = sphi 0, %s47
      %s49 = sphi 0, %s47
      %s50 = sphi 0, %s49
      %s64 = sphi 0, %s50
      %s68 = sphi 0, %s68
      %s70 = sphi 0, %s68
      %s71 = sphi 0, %s70
      %s85 = sphi 0, %s71
      %s91 = sphi 0, %s93
      %s94 = sphi 0, %s91
      %s95 = sphi 0, %s94
      %s111 = sphi 0, %s95
    $region4: #{a_call__.1} parent=1 // loop_header_branch
      %16 = sbr.rel (%p14) target = $region8
    $region5: #{a_call__.1} parent=1 // loop_body
      %s18 = ssub.s32 %s13, 1
      %s19 = ssub.s32 %s13, 2
      %s20 = sadd.s32 %s13, 1
      %s21 = ssub.s32 %s13, %s20
      %p22 = scmp.eq.s32.totalorder %s21, 0
      %s24 = sadd.s32 %s23, 1
      %s25 = scalar_select %p22, %s23, %s24
      %p28 = pneg %p22
      %p29 = scmp.eq.s32.totalorder %s13, 1
      %p30 = por %p28, %p29
      %p31 = scmp.ne.s32.totalorder %s23, %s26
      %p32 = scmp.eq.s32.totalorder %s13, 0
      %p33 = por %p31, %p32
      %p34 = scmp.ne.s32.totalorder %s23, %s26
      %p35 = scmp.eq.s32.totalorder %s18, 1
      %p36 = por %p34, %p35
      %p37 = scmp.ne.s32.totalorder %s26, %s27
      %p38 = scmp.eq.s32.totalorder %s18, 0
      %p39 = por %p37, %p38
      %p40 = scmp.ne.s32.totalorder %s26, %s27
      %p41 = scmp.eq.s32.totalorder %s19, 1
      %p42 = por %p40, %p41
      %p44 = scmp.ne.s32.totalorder %s27, %s43
      %p45 = scmp.eq.s32.totalorder %s19, 0
      %p46 = por %p44, %p45
      %s48 = sadd.s32 %s47, 1
      %p51 = scmp.eq.s32.totalorder %s13, 1
      %p52 = scmp.ne.s32.totalorder %s47, %s49
      %p53 = scmp.eq.s32.totalorder %s13, 0
      %p54 = por %p52, %p53
      %p55 = scmp.ne.s32.totalorder %s47, %s49
      %p56 = scmp.eq.s32.totalorder %s18, 1
      %p57 = por %p55, %p56
      %p58 = scmp.ne.s32.totalorder %s49, %s50
      %p59 = scmp.eq.s32.totalorder %s18, 0
      %p60 = por %p58, %p59
      %p61 = scmp.ne.s32.totalorder %s49, %s50
      %p62 = scmp.eq.s32.totalorder %s19, 1
      %p63 = por %p61, %p62
      %p65 = scmp.ne.s32.totalorder %s50, %s64
      %p66 = scmp.eq.s32.totalorder %s19, 0
      %p67 = por %p65, %p66
      %s69 = sadd.s32 %s68, 1
      %p72 = scmp.eq.s32.totalorder %s13, 1
      %p73 = scmp.ne.s32.totalorder %s68, %s70
      %p74 = scmp.eq.s32.totalorder %s13, 0
      %p75 = por %p73, %p74
      %p76 = scmp.ne.s32.totalorder %s68, %s70
      %p77 = scmp.eq.s32.totalorder %s18, 1
      %p78 = por %p76, %p77
      %p79 = scmp.ne.s32.totalorder %s70, %s71
      %p80 = scmp.eq.s32.totalorder %s18, 0
      %p81 = por %p79, %p80
      %p82 = scmp.ne.s32.totalorder %s70, %s71
      %p83 = scmp.eq.s32.totalorder %s19, 1
      %p84 = por %p82, %p83
      %p86 = scmp.ne.s32.totalorder %s71, %s85
      %p87 = scmp.eq.s32.totalorder %s19, 0
      %p88 = por %p86, %p87
      %s89 = ssub.s32 %s13, %s20
      %p90 = scmp.eq.s32.totalorder %s89, 0
      %s92 = sadd.s32 %s91, 1
      %s93 = scalar_select %p90, %s91, %s92
      %p96 = pneg %p90
      %p97 = scmp.eq.s32.totalorder %s13, 1
      %p98 = por %p96, %p97
      %p99 = scmp.ne.s32.totalorder %s91, %s94
      %p100 = scmp.eq.s32.totalorder %s13, 0
      %p101 = por %p99, %p100
      %p102 = scmp.ne.s32.totalorder %s91, %s94
      %p103 = scmp.eq.s32.totalorder %s18, 1
      %p104 = por %p102, %p103
      %p105 = scmp.ne.s32.totalorder %s94, %s95
      %p106 = scmp.eq.s32.totalorder %s18, 0
      %p107 = por %p105, %p106
      %p108 = scmp.ne.s32.totalorder %s94, %s95
      %p109 = scmp.eq.s32.totalorder %s19, 1
      %p110 = por %p108, %p109
      %p112 = scmp.ne.s32.totalorder %s95, %s111
      %p113 = scmp.eq.s32.totalorder %s19, 0
      %p114 = por %p112, %p113
      %p115 = scmp.le.s32.totalorder 1, %s13
      %p116 = scmp.lt.s32.totalorder %s13, 3
      %p117 = pnand %p115, %p116
      %p118 = pneg %p117
      // Predicated region
      $region9: #{a_call__.1} parent=5 // pred_check
        _
      $region10: #{a_call__.1} parent=5 // pred_check_branch
        %120 = sbr.rel (%p117) target = $region12
      $region11: #{a_call__.1} parent=5 // pred_region
        %s121 = ssub.s32 %s13, 1
        // Predicated region
        $region13: #{a_call__.1} parent=11 // pred_check
          %p122 = pneg %p60
        $region14: #{a_call__.1} parent=11 // pred_check_branch
          %124 = sbr.rel (%p122) target = $region16
        $region15: #{a_call__.1} parent=11 // pred_region
          %s126 = ssub.s32 1024, 1024
          %127 = vsyncadd [#allocation5], %s126
          %s128 = sshll.u32 [#allocation4], 4
          %s129 = int_to_ptr.vmem [resolvable:$true] %s128
          %134 = dma.hbm_to_vmem [thread:$0]  %s1, 1024, %s129, [#allocation5], 64, 64, 4
        $region16: #{a_call__.1} parent=11 // pred_fallthru
          _
        // Predicated region
        $region17: #{a_call__.1} parent=11 // pred_check
          %p135 = pneg %p81
        $region18: #{a_call__.1} parent=11 // pred_check_branch
          %137 = sbr.rel (%p135) target = $region20
        $region19: #{a_call__.1} parent=11 // pred_region
          _
        $region20: #{a_call__.1} parent=11 // pred_fallthru
          _
      $region12: #{a_call__.1} parent=5 // pred_fallthru
        _
      %p138 = scmp.lt.s32.totalorder %s13, 2
      // Predicated region
      $region21: #{a_call__.1} parent=5 // pred_check
        %p139 = pneg %p138
      $region22: #{a_call__.1} parent=5 // pred_check_branch
        %141 = sbr.rel (%p139) target = $region24
      $region23: #{a_call__.1} parent=5 // pred_region
        // Predicated region
        $region25: #{a_call__.1} parent=23 // pred_check
          %p142 = pneg %p33
        $region26: #{a_call__.1} parent=23 // pred_check_branch
          %144 = sbr.rel (%p142) target = $region28
        $region27: #{a_call__.1} parent=23 // pred_region
          %s145 = sand.u32 %s23, 1
          %s146 = scalar_lea.sflag [#allocation3], %s145
          %s147 = sand.u32 %s23, 1
          %s148 = smul.addr %s147, 128
          %s149 = scalar_lea.vmem [#allocation2], %s148
          %s150 = smul.u32 16, %s13
          %s152 = ssub.s32 2048, 2048
          %153 = vsyncadd %s146, %s152
          %s154 = smul.addr %s150, 128
          %s155 = scalar_lea.hbm %s0, %s154
          %s156 = sshll.u32 %s149, 4
          %s157 = int_to_ptr.vmem [resolvable:$true] %s156
          %162 = dma.hbm_to_vmem [thread:$0]  %s155, 2048, %s157, %s146, 128, 128, 8
        $region28: #{a_call__.1} parent=23 // pred_fallthru
          _
      $region24: #{a_call__.1} parent=5 // pred_fallthru
        _
      %p163 = scmp.le.s32.totalorder 1, %s13
      %p164 = scmp.lt.s32.totalorder %s13, 3
      %p165 = pnand %p163, %p164
      %p166 = pneg %p165
      // Predicated region
      $region29: #{a_call__.1} parent=5 // pred_check
        _
      $region30: #{a_call__.1} parent=5 // pred_check_branch
        %168 = sbr.rel (%p165) target = $region32
      $region31: #{a_call__.1} parent=5 // pred_region
        %s169 = ssub.s32 %s13, 1
        %s170 = sand.u32 %s26, 1
        %s171 = scalar_lea.sflag [#allocation3], %s170
        %s172 = sand.u32 %s26, 1
        %s173 = smul.addr %s172, 128
        %s174 = scalar_lea.vmem [#allocation2], %s173
        // Predicated region
        $region33: #{a_call__.1} parent=31 // pred_check
          %p175 = pneg %p39
        $region34: #{a_call__.1} parent=31 // pred_check_branch
          %177 = sbr.rel (%p175) target = $region36
        $region35: #{a_call__.1} parent=31 // pred_region
          %178 = dma.done %s171, 2048
        $region36: #{a_call__.1} parent=31 // pred_fallthru
          _
        // Predicated region
        $region37: #{a_call__.1} parent=31 // pred_check
          %p179 = pneg %p60
        $region38: #{a_call__.1} parent=31 // pred_check_branch
          %181 = sbr.rel (%p179) target = $region40
        $region39: #{a_call__.1} parent=31 // pred_region
          %182 = dma.done [#allocation5], 1024
        $region40: #{a_call__.1} parent=31 // pred_fallthru
          _
        %s183 = sand.u32 %s26, 1
        %s184 = scalar_lea.sflag [#allocation3], %s183
        %s185 = sand.u32 %s26, 1
        %s186 = smul.addr %s185, 128
        %s187 = scalar_lea.vmem [#allocation2], %s186
        %p188 = pneg %p39
        %p189 = pneg %p36
        %p190 = pneg %p60
        %p191 = pneg %p57
        %p192 = pneg %p81
        %p193 = pneg %p78
        %p194 = pneg %p107
        %p195 = pneg %p104
        %s196 = smul.u32 16, %s18
        %p197 = scmp.lt.s32.totalorder %s196, 31
        %s198 = scalar_select %p197, %s196, 31
        %s199 = smul.addr %s198, 4
        %s200 = scalar_lea.vmem %s3, %s199
        %s201 = smul.u32 16, %s18
        %s202 = smul.u32 16, %s18
        %p203 = scmp.lt.s32.totalorder %s202, 31
        %s204 = scalar_select %p203, %s202, 31
        %s205 = smul.addr %s204, 4
        %s206 = scalar_lea.vmem %s3, %s205
        %s207 = smul.u32 16, %s18
        %v209 = vld [vmem:[%s174] sm:$0xff]
        %v210 = vld [vmem:[%s174 + $0x8] sm:$0xff]
        %v211 = vld [vmem:[%s174 + $0x10] sm:$0xff]
        %v212 = vld [vmem:[%s174 + $0x18] sm:$0xff]
        %v213 = vld [vmem:[%s174 + $0x20] sm:$0xff]
        %v214 = vld [vmem:[%s174 + $0x28] sm:$0xff]
        %v215 = vld [vmem:[%s174 + $0x30] sm:$0xff]
        %v216 = vld [vmem:[%s174 + $0x38] sm:$0xff]
        %v217 = vld [vmem:[%s174 + $0x40] sm:$0xff]
        %v218 = vld [vmem:[%s174 + $0x48] sm:$0xff]
        %v219 = vld [vmem:[%s174 + $0x50] sm:$0xff]
        %v220 = vld [vmem:[%s174 + $0x58] sm:$0xff]
        %v221 = vld [vmem:[%s174 + $0x60] sm:$0xff]
        %v222 = vld [vmem:[%s174 + $0x68] sm:$0xff]
        %v223 = vld [vmem:[%s174 + $0x70] sm:$0xff]
        %v224 = vld [vmem:[%s174 + $0x78] sm:$0xff]
        %v225 = vpack.c.bf16 %v210, %v209
        %v226 = vpack.c.bf16 %v212, %v211
        %v227 = vpack.c.bf16 %v214, %v213
        %v228 = vpack.c.bf16 %v216, %v215
        %v229 = vpack.c.bf16 %v218, %v217
        %v230 = vpack.c.bf16 %v220, %v219
        %v231 = vpack.c.bf16 %v222, %v221
        %v232 = vpack.c.bf16 %v224, %v223
        %v233 = vld [vmem:[#allocation4] sm:$0xf]
        %v234 = vld [vmem:[#allocation4 + $0x4] sm:$0xf]
        %v235 = vld [vmem:[#allocation4 + $0x8] sm:$0xf]
        %v236 = vld [vmem:[#allocation4 + $0xc] sm:$0xf]
        %v237 = vld [vmem:[#allocation4 + $0x10] sm:$0xf]
        %v238 = vld [vmem:[#allocation4 + $0x14] sm:$0xf]
        %v239 = vld [vmem:[#allocation4 + $0x18] sm:$0xf]
        %v240 = vld [vmem:[#allocation4 + $0x1c] sm:$0xf]
        %v241 = vld [vmem:[#allocation4 + $0x20] sm:$0xf]
        %v242 = vld [vmem:[#allocation4 + $0x24] sm:$0xf]
        %v243 = vld [vmem:[#allocation4 + $0x28] sm:$0xf]
        %v244 = vld [vmem:[#allocation4 + $0x2c] sm:$0xf]
        %v245 = vld [vmem:[#allocation4 + $0x30] sm:$0xf]
        %v246 = vld [vmem:[#allocation4 + $0x34] sm:$0xf]
        %v247 = vld [vmem:[#allocation4 + $0x38] sm:$0xf]
        %v248 = vld [vmem:[#allocation4 + $0x3c] sm:$0xf]
        %v249 = vld [vmem:[%s2] sm:$0x1]
        %v251 = vlaneseq
        %v252 = vshrl.u32 %v251, 7
        %v253 = vsub.s32 0, %v252
        %v254 = vrot.slane %v249, %v253
        %v272 = vunpack.c.l.b16 %v233
        %v273 = vunpack.c.l.b16 %v234
        %v274 = vunpack.c.l.b16 %v235
        %v275 = vunpack.c.l.b16 %v236
        %v276 = vunpack.c.l.b16 %v237
        %v277 = vunpack.c.l.b16 %v238
        %v278 = vunpack.c.l.b16 %v239
        %v279 = vunpack.c.l.b16 %v240
        %v280 = vunpack.c.l.b16 %v241
        %v281 = vunpack.c.l.b16 %v242
        %v282 = vunpack.c.l.b16 %v243
        %v283 = vunpack.c.l.b16 %v244
        %v284 = vunpack.c.l.b16 %v245
        %v285 = vunpack.c.l.b16 %v246
        %v286 = vunpack.c.l.b16 %v247
        %v287 = vunpack.c.l.b16 %v248
        %v288 = vpack.c.b16 %v273, %v272
        %v289 = vpack.c.b16 %v275, %v274
        %v290 = vpack.c.b16 %v277, %v276
        %v291 = vpack.c.b16 %v279, %v278
        %v292 = vpack.c.b16 %v281, %v280
        %v293 = vpack.c.b16 %v283, %v282
        %v294 = vpack.c.b16 %v285, %v284
        %v295 = vpack.c.b16 %v287, %v286
        %304 = vmatprep.subr.bf16.mxu0 0
        %305 = vmatpush1.bf16.msra.mxu0 %v288
        %306 = vmatprep.subr.bf16.mxu0 0
        %307 = vmatpush1.bf16.msra.mxu0 %v289
        %308 = vmatprep.subr.bf16.mxu0 0
        %309 = vmatpush1.bf16.msra.mxu0 %v290
        %310 = vmatprep.subr.bf16.mxu0 0
        %311 = vmatpush1.bf16.msra.mxu0 %v291
        %312 = vmatprep.subr.bf16.mxu0 0
        %313 = vmatpush1.bf16.msra.mxu0 %v292
        %314 = vmatprep.subr.bf16.mxu0 0
        %315 = vmatpush1.bf16.msra.mxu0 %v293
        %316 = vmatprep.subr.bf16.mxu0 0
        %317 = vmatpush1.bf16.msra.mxu0 %v294
        %318 = vmatprep.subr.bf16.mxu0 0
        %319 = vmatpush1.bf16.msra.mxu0 %v295
        %320 = vmatprep.subr.bf16.mxu0 0
        %321 = vmatpush1.bf16.msra.mxu0 0
        %322 = vmatprep.subr.bf16.mxu0 0
        %323 = vmatpush1.bf16.msra.mxu0 0
        %324 = vmatprep.subr.bf16.mxu0 0
        %325 = vmatpush1.bf16.msra.mxu0 0
        %326 = vmatprep.subr.bf16.mxu0 0
        %327 = vmatpush1.bf16.msra.mxu0 0
        %328 = vmatprep.subr.bf16.mxu0 0
        %329 = vmatpush1.bf16.msra.mxu0 0
        %330 = vmatprep.subr.bf16.mxu0 0
        %331 = vmatpush1.bf16.msra.mxu0 0
        %332 = vmatprep.subr.bf16.mxu0 0
        %333 = vmatpush1.bf16.msra.mxu0 0
        %334 = vmatprep.subr.bf16.mxu0 0
        %335 = vmatpush1.bf16.msra.mxu0 0
        %336 = vmatprep.mubr.bf16.mxu0 0
        %337 = vmatmul.mubr.bf16.gmra.mrb[0].mxu0 %v225
        %v338 = vpop.f32.mrb[0].mxu0
        %v339 = vadd.f32 %v254, %v338
        %v340 = vpop.f32.mrb[0].mxu0
        %v341 = vpop.f32.mrb[0].mxu0
        %v342 = vadd.f32 %v254, %v341
        %v343 = vpop.f32.mrb[0].mxu0
        %344 = vmatprep.mubr.bf16.mxu0 0
        %345 = vmatmul.mubr.bf16.gmra.mrb[0].mxu0 %v226
        %v346 = vpop.f32.mrb[0].mxu0
        %v347 = vadd.f32 %v254, %v346
        %v348 = vpop.f32.mrb[0].mxu0
        %v349 = vpop.f32.mrb[0].mxu0
        %v350 = vadd.f32 %v254, %v349
        %v351 = vpop.f32.mrb[0].mxu0
        %352 = vmatprep.mubr.bf16.mxu0 0
        %353 = vmatmul.mubr.bf16.gmra.mrb[0].mxu0 %v227
        %v354 = vpop.f32.mrb[0].mxu0
        %v355 = vadd.f32 %v254, %v354
        %v356 = vpop.f32.mrb[0].mxu0
        %v357 = vpop.f32.mrb[0].mxu0
        %v358 = vadd.f32 %v254, %v357
        %v359 = vpop.f32.mrb[0].mxu0
        %360 = vmatprep.mubr.bf16.mxu0 0
        %361 = vmatmul.mubr.bf16.gmra.mrb[0].mxu0 %v228
        %v362 = vpop.f32.mrb[0].mxu0
        %v363 = vadd.f32 %v254, %v362
        %v364 = vpop.f32.mrb[0].mxu0
        %v365 = vpop.f32.mrb[0].mxu0
        %v366 = vadd.f32 %v254, %v365
        %v367 = vpop.f32.mrb[0].mxu0
        %368 = vmatprep.mubr.bf16.mxu0 0
        %369 = vmatmul.mubr.bf16.gmra.mrb[0].mxu0 %v229
        %v370 = vpop.f32.mrb[0].mxu0
        %v371 = vadd.f32 %v254, %v370
        %v372 = vpop.f32.mrb[0].mxu0
        %v373 = vpop.f32.mrb[0].mxu0
        %v374 = vadd.f32 %v254, %v373
        %v375 = vpop.f32.mrb[0].mxu0
        %376 = vmatprep.mubr.bf16.mxu0 0
        %377 = vmatmul.mubr.bf16.gmra.mrb[0].mxu0 %v230
        %v378 = vpop.f32.mrb[0].mxu0
        %v379 = vadd.f32 %v254, %v378
        %v380 = vpop.f32.mrb[0].mxu0
        %v381 = vpop.f32.mrb[0].mxu0
        %v382 = vadd.f32 %v254, %v381
        %v383 = vpop.f32.mrb[0].mxu0
        %384 = vmatprep.mubr.bf16.mxu0 0
        %385 = vmatmul.mubr.bf16.gmra.mrb[0].mxu0 %v231
        %v386 = vpop.f32.mrb[0].mxu0
        %v387 = vadd.f32 %v254, %v386
        %v388 = vpop.f32.mrb[0].mxu0
        %v389 = vpop.f32.mrb[0].mxu0
        %v390 = vadd.f32 %v254, %v389
        %v391 = vpop.f32.mrb[0].mxu0
        %392 = vmatprep.mubr.bf16.mxu0 0
        %393 = vmatmul.mubr.bf16.gmra.mrb[0].mxu0 %v232
        %v394 = vpop.f32.mrb[0].mxu0
        %v395 = vadd.f32 %v254, %v394
        %v396 = vpop.f32.mrb[0].mxu0
        %v397 = vpop.f32.mrb[0].mxu0
        %v398 = vadd.f32 %v254, %v397
        %v399 = vpop.f32.mrb[0].mxu0
        %400 = vdwg.mxu0
        %v401 = vpack.c.bf16 %v342, %v339
        %v402 = vpack.c.bf16 %v350, %v347
        %v403 = vpack.c.bf16 %v358, %v355
        %v404 = vpack.c.bf16 %v366, %v363
        %v405 = vpack.c.bf16 %v374, %v371
        %v406 = vpack.c.bf16 %v382, %v379
        %v407 = vpack.c.bf16 %v390, %v387
        %v408 = vpack.c.bf16 %v398, %v395
        %v417 = vunpack.c.l.b16 %v401
        %v418 = vunpack.c.h.b16 %v401
        %v419 = vunpack.c.l.b16 %v402
        %v420 = vunpack.c.h.b16 %v402
        %v421 = vunpack.c.l.b16 %v403
        %v422 = vunpack.c.h.b16 %v403
        %v423 = vunpack.c.l.b16 %v404
        %v424 = vunpack.c.h.b16 %v404
        %v425 = vunpack.c.l.b16 %v405
        %v426 = vunpack.c.h.b16 %v405
        %v427 = vunpack.c.l.b16 %v406
        %v428 = vunpack.c.h.b16 %v406
        %v429 = vunpack.c.l.b16 %v407
        %v430 = vunpack.c.h.b16 %v407
        %v431 = vunpack.c.l.b16 %v408
        %v432 = vunpack.c.h.b16 %v408
        %v433 = vpack.c.b16 %v417, %v417
        %v434 = vpack.c.b16 %v418, %v418
        %v435 = vpack.c.b16 %v419, %v419
        %v436 = vpack.c.b16 %v420, %v420
        %v437 = vpack.c.b16 %v421, %v421
        %v438 = vpack.c.b16 %v422, %v422
        %v439 = vpack.c.b16 %v423, %v423
        %v440 = vpack.c.b16 %v424, %v424
        %v441 = vpack.c.b16 %v425, %v425
        %v442 = vpack.c.b16 %v426, %v426
        %v443 = vpack.c.b16 %v427, %v427
        %v444 = vpack.c.b16 %v428, %v428
        %v445 = vpack.c.b16 %v429, %v429
        %v446 = vpack.c.b16 %v430, %v430
        %v447 = vpack.c.b16 %v431, %v431
        %v448 = vpack.c.b16 %v432, %v432
        %465 = vst [vmem:[%s206] sm:$0xf] %v433
        %466 = vst [vmem:[%s206 + $0x4] sm:$0xf] %v434
        %467 = vst [vmem:[%s206 + $0x8] sm:$0xf] %v435
        %468 = vst [vmem:[%s206 + $0xc] sm:$0xf] %v436
        %469 = vst [vmem:[%s206 + $0x10] sm:$0xf] %v437
        %470 = vst [vmem:[%s206 + $0x14] sm:$0xf] %v438
        %471 = vst [vmem:[%s206 + $0x18] sm:$0xf] %v439
        %472 = vst [vmem:[%s206 + $0x1c] sm:$0xf] %v440
        %473 = vst [vmem:[%s206 + $0x20] sm:$0xf] %v441
        %474 = vst [vmem:[%s206 + $0x24] sm:$0xf] %v442
        %475 = vst [vmem:[%s206 + $0x28] sm:$0xf] %v443
        %476 = vst [vmem:[%s206 + $0x2c] sm:$0xf] %v444
        %477 = vst [vmem:[%s206 + $0x30] sm:$0xf] %v445
        %478 = vst [vmem:[%s206 + $0x34] sm:$0xf] %v446
        %479 = vst [vmem:[%s206 + $0x38] sm:$0xf] %v447
        %480 = vst [vmem:[%s206 + $0x3c] sm:$0xf] %v448
        %s481 = smul.u32 16, %s18
        %p482 = scmp.lt.s32.totalorder %s481, 31
        %s483 = scalar_select %p482, %s481, 31
        %s484 = smul.addr %s483, 4
        %s485 = scalar_lea.vmem %s3, %s484
        // Predicated region
        $region41: #{a_call__.1} parent=31 // pred_check
          %p486 = pneg %p104
        $region42: #{a_call__.1} parent=31 // pred_check_branch
          %488 = sbr.rel (%p486) target = $region44
        $region43: #{a_call__.1} parent=31 // pred_region
          %s489 = smul.u32 16, %s18
        $region44: #{a_call__.1} parent=31 // pred_fallthru
          _
      $region32: #{a_call__.1} parent=5 // pred_fallthru
        _
      %p490 = scmp.le.s32.totalorder 2, %s13
      // Predicated region
      $region45: #{a_call__.1} parent=5 // pred_check
        %p491 = pneg %p490
      $region46: #{a_call__.1} parent=5 // pred_check_branch
        %493 = sbr.rel (%p491) target = $region48
      $region47: #{a_call__.1} parent=5 // pred_region
        %s494 = ssub.s32 %s13, 2
        // Predicated region
        $region49: #{a_call__.1} parent=47 // pred_check
          %p495 = pneg %p110
        $region50: #{a_call__.1} parent=47 // pred_check_branch
          %497 = sbr.rel (%p495) target = $region52
        $region51: #{a_call__.1} parent=47 // pred_region
          %s498 = smul.u32 16, %s19
          %p499 = scmp.lt.s32.totalorder %s498, 31
          %s500 = scalar_select %p499, %s498, 31
          %s501 = smul.addr %s500, 4
          %s502 = scalar_lea.vmem %s3, %s501
        $region52: #{a_call__.1} parent=47 // pred_fallthru
          _
      $region48: #{a_call__.1} parent=5 // pred_fallthru
        _
    $region6: #{a_call__.1} parent=1 // loop_footer
      %s17 = sadd.s32 1, %s13
    $region7: #{a_call__.1} parent=1 // loop_footer_branch
      %12 = sbr.rel target = $region3
    $region8: #{a_call__.1} parent=1 // loop_exit
      _
    %503 = vsyncpa [#allocation3], 1
    %s504 = scalar_lea.sflag [#allocation3], 1
    %505 = vsyncpa %s504, 1
    %506 = vsyncpa [#allocation5], 1

</llo_original>
